<compile_context>
chip_gen: v7x
topology: tpu7x:2x2x1
jax: 0.10.0
libtpu: 0.0.40
codegen_flags: <defaults>
</compile_context>

<pallas_src>
import functools

import jax
import jax.numpy as jnp
from jax.experimental import pallas as pl
from jax.experimental.pallas import tpu as pltpu


def _round_up(x: int, m: int) -> int:
    return (x + m - 1) // m * m


def _mlp_kernel(*refs, num_layers: int, activation: str, mxu_dtype):
    """refs = (x_ref, w_0..w_{L-1}, b_0..b_{L-1}, o_ref).

    Weights are (Din, Dout) in `mxu_dtype`; biases are (1, Dout) f32.
    All math (bias add, activation) is done on the f32 accumulator; only the
    matmul inputs are cast to `mxu_dtype`.
    """
    x_ref = refs[0]
    w_refs = refs[1:1 + num_layers]
    b_refs = refs[1 + num_layers:1 + 2 * num_layers]
    o_ref = refs[1 + 2 * num_layers]

    h = x_ref[...].astype(jnp.float32)                 # (tm, D0)
    for i in range(num_layers):                        # static unroll over layers
        h = jnp.dot(h.astype(mxu_dtype), w_refs[i][...],
                    preferred_element_type=jnp.float32) + b_refs[i][...]
        if i != num_layers - 1:
            if activation == "ReLU":
                h = jnp.maximum(h, 0.0)
            elif activation == "LeakyReLU":
                h = jnp.where(h > 0, h, 0.01 * h)
            # "Identity": no-op
    o_ref[...] = h.astype(o_ref.dtype)


def init_mlp_params(key, input_dim, output_dim, hsize_list):
    """PyTorch-style init: U(-1/sqrt(fan_in), 1/sqrt(fan_in)); W is (Dout, Din)."""
    dims = [input_dim] + list(hsize_list) + [output_dim]
    params = []
    for i in range(len(dims) - 1):
        din, dout = dims[i], dims[i + 1]
        key, kw, kb = jax.random.split(key, 3)
        bound = 1.0 / jnp.sqrt(jnp.float32(din))
        w = jax.random.uniform(kw, (dout, din), jnp.float32, -bound, bound)
        b = jax.random.uniform(kb, (dout,), jnp.float32, -bound, bound)
        params.append((w, b))
    return params


def make_fused_mlp(params, activation="ReLU", mxu_dtype=jnp.bfloat16,
                   batch_tile=256):
    """Build a jitted forward fn for PyTorch-layout `params` = [(W(Dout,Din), b(Dout,)), ...].

    Weight transpose + dtype cast happens here, once.
    """
    if activation not in ("ReLU", "LeakyReLU", "Identity"):
        raise RuntimeError(f"Activation {activation} is not supported.")

    num_layers = len(params)
    input_dim = params[0][0].shape[1]
    output_dim = params[-1][0].shape[0]

    # (Din, Dout) weights in the MXU input dtype; f32 (1, Dout) biases.
    ws = [jnp.asarray(w.T, mxu_dtype) for w, _ in params]
    bs = [jnp.asarray(b, jnp.float32).reshape(1, -1) for _, b in params]

    kernel = functools.partial(_mlp_kernel, num_layers=num_layers,
                               activation=activation, mxu_dtype=mxu_dtype)

    # True (unpadded) per-row cost for the CostEstimate.
    flops_per_row = sum(2 * w.shape[0] * w.shape[1] for w in ws)
    weight_bytes = (sum(w.size * w.dtype.itemsize for w in ws)
                    + sum(b.size * b.dtype.itemsize for b in bs))

    def forward(x):
        B, Din = x.shape
        assert Din == input_dim

        if B <= batch_tile:
            # Single batch tile: full-array blocks everywhere, no padding,
            # no wrapper-side pad/slice ops.
            tm, B_p, x_p = B, B, x
        else:
            # Tile the batch; tm is a multiple of 16 so it is legal for both
            # f32 (8-sublane) and bf16 (16-sublane) packing.
            tm = batch_tile
            B_p = _round_up(B, tm)
            x_p = x if B_p == B else jnp.pad(x, ((0, B_p - B), (0, 0)))

        grid = (B_p // tm,)
        flops = flops_per_row * B
        bytes_accessed = (B * Din * x.dtype.itemsize
                          + weight_bytes
                          + B * output_dim * x.dtype.itemsize)

        out = pl.pallas_call(
            kernel,
            out_shape=jax.ShapeDtypeStruct((B_p, output_dim), x.dtype),
            grid=grid,
            in_specs=(
                [pl.BlockSpec((tm, input_dim), lambda i: (i, 0))]
                # Weights/biases: full-array blocks, constant index_map ->
                # fetched once, VMEM-resident across batch tiles.
                + [pl.BlockSpec(w.shape, lambda i: (0, 0)) for w in ws]
                + [pl.BlockSpec(b.shape, lambda i: (0, 0)) for b in bs]
            ),
            out_specs=pl.BlockSpec((tm, output_dim), lambda i: (i, 0)),
            compiler_params=pltpu.CompilerParams(
                dimension_semantics=("parallel",)),
            cost_estimate=pl.CostEstimate(flops=flops, transcendentals=0,
                                          bytes_accessed=bytes_accessed),
        )(x_p, *ws, *bs)

        return out if B_p == B else out[:B]

    return jax.jit(forward)


if __name__ == "__main__":
    key = jax.random.PRNGKey(0)
    batch, input_dim, output_dim = 8, 32, 16
    hsize_list = [64, 48]
    activation = "ReLU"
    mxu_dtype = jnp.bfloat16

    kx, kp = jax.random.split(key)
    x = jax.random.normal(kx, (batch, input_dim), jnp.float32)
    params = init_mlp_params(kp, input_dim, output_dim, hsize_list)

    mlp = make_fused_mlp(params, activation=activation, mxu_dtype=mxu_dtype)
    out = mlp(x)
    jax.block_until_ready(out)

    # Reference in plain JAX with the same quantization semantics as the
    # kernel (bf16 matmul inputs, f32 accumulation / bias / activation).
    ref = x
    for i, (w, b) in enumerate(params):
        ref = jnp.dot(ref.astype(mxu_dtype), w.T.astype(mxu_dtype),
                      preferred_element_type=jnp.float32) + b
        if i != len(params) - 1:
            if activation == "ReLU":
                ref = jnp.maximum(ref, 0.0)
            elif activation == "LeakyReLU":
                ref = jnp.where(ref > 0, ref, 0.01 * ref)

    assert out.shape == (batch, output_dim)
    assert jnp.allclose(out, ref, atol=1e-2, rtol=1e-2)

    print("KERNEL_OK")
</pallas_src>

<mosaic_0001>
module attributes {stable_mosaic.version = 11 : i64} {
  func.func @_mlp_kernel(%arg0: i32, %arg1: memref<8x32xf32, #tpu.memory_space<vmem>>, %arg2: memref<32x64xbf16, #tpu.memory_space<vmem>>, %arg3: memref<64x48xbf16, #tpu.memory_space<vmem>>, %arg4: memref<48x16xbf16, #tpu.memory_space<vmem>>, %arg5: memref<1x64xf32, #tpu.memory_space<vmem>>, %arg6: memref<1x48xf32, #tpu.memory_space<vmem>>, %arg7: memref<1x16xf32, #tpu.memory_space<vmem>>, %arg8: memref<8x16xf32, #tpu.memory_space<vmem>>) attributes {dimension_semantics = [#tpu.dimension_semantics<parallel>], iteration_bounds = array<i64: 1>, scalar_prefetch = 0 : i64, scratch_operands = 0 : i64, tpu.core_type = #tpu.core_type<tc>, window_params = [{transform_indices = @transform_0, window_bounds = array<i64: 8, 32>}, {pipeline_mode = #tpu.pipeline_mode<synchronous>, transform_indices = @transform_1, window_bounds = array<i64: 32, 64>}, {pipeline_mode = #tpu.pipeline_mode<synchronous>, transform_indices = @transform_2, window_bounds = array<i64: 64, 48>}, {pipeline_mode = #tpu.pipeline_mode<synchronous>, transform_indices = @transform_3, window_bounds = array<i64: 48, 16>}, {pipeline_mode = #tpu.pipeline_mode<synchronous>, transform_indices = @transform_4, window_bounds = array<i64: 1, 64>}, {pipeline_mode = #tpu.pipeline_mode<synchronous>, transform_indices = @transform_5, window_bounds = array<i64: 1, 48>}, {pipeline_mode = #tpu.pipeline_mode<synchronous>, transform_indices = @transform_6, window_bounds = array<i64: 1, 16>}, {transform_indices = @transform_7, window_bounds = array<i64: 8, 16>}]} {
    %c0 = arith.constant 0 : index
    %c0_0 = arith.constant 0 : index
    %0 = vector.load %arg1[%c0, %c0_0] : memref<8x32xf32, #tpu.memory_space<vmem>>, vector<8x32xf32>
    %1 = arith.truncf %0 : vector<8x32xf32> to vector<8x32xbf16>
    %c0_1 = arith.constant 0 : index
    %c0_2 = arith.constant 0 : index
    %2 = vector.load %arg2[%c0_1, %c0_2] : memref<32x64xbf16, #tpu.memory_space<vmem>>, vector<32x64xbf16>
    %cst = arith.constant dense<0.000000e+00> : vector<8x64xf32>
    %3 = tpu.matmul %1, %2, %cst {dimension_numbers = #tpu.dot_dimension_numbers<[1], [0], [0], [1], [0, 0, 1, 1], [], []>} : vector<8x32xbf16>, vector<32x64xbf16>, vector<8x64xf32> -> vector<8x64xf32>
    %c0_3 = arith.constant 0 : index
    %c0_4 = arith.constant 0 : index
    %4 = vector.load %arg5[%c0_3, %c0_4] : memref<1x64xf32, #tpu.memory_space<vmem>>, vector<1x64xf32>
    %5 = vector.broadcast %4 : vector<1x64xf32> to vector<8x64xf32>
    %6 = arith.addf %3, %5 : vector<8x64xf32>
    %cst_5 = arith.constant 0.000000e+00 : f32
    %7 = vector.broadcast %cst_5 : f32 to vector<8x64xf32>
    %8 = arith.maximumf %6, %7 : vector<8x64xf32>
    %9 = arith.truncf %8 : vector<8x64xf32> to vector<8x64xbf16>
    %c0_6 = arith.constant 0 : index
    %c0_7 = arith.constant 0 : index
    %10 = vector.load %arg3[%c0_6, %c0_7] : memref<64x48xbf16, #tpu.memory_space<vmem>>, vector<64x48xbf16>
    %cst_8 = arith.constant dense<0.000000e+00> : vector<8x48xf32>
    %11 = tpu.matmul %9, %10, %cst_8 {dimension_numbers = #tpu.dot_dimension_numbers<[1], [0], [0], [1], [0, 0, 1, 1], [], []>} : vector<8x64xbf16>, vector<64x48xbf16>, vector<8x48xf32> -> vector<8x48xf32>
    %c0_9 = arith.constant 0 : index
    %c0_10 = arith.constant 0 : index
    %12 = vector.load %arg6[%c0_9, %c0_10] : memref<1x48xf32, #tpu.memory_space<vmem>>, vector<1x48xf32>
    %13 = vector.broadcast %12 : vector<1x48xf32> to vector<8x48xf32>
    %14 = arith.addf %11, %13 : vector<8x48xf32>
    %cst_11 = arith.constant 0.000000e+00 : f32
    %15 = vector.broadcast %cst_11 : f32 to vector<8x48xf32>
    %16 = arith.maximumf %14, %15 : vector<8x48xf32>
    %17 = arith.truncf %16 : vector<8x48xf32> to vector<8x48xbf16>
    %c0_12 = arith.constant 0 : index
    %c0_13 = arith.constant 0 : index
    %18 = vector.load %arg4[%c0_12, %c0_13] : memref<48x16xbf16, #tpu.memory_space<vmem>>, vector<48x16xbf16>
    %cst_14 = arith.constant dense<0.000000e+00> : vector<8x16xf32>
    %19 = tpu.matmul %17, %18, %cst_14 {dimension_numbers = #tpu.dot_dimension_numbers<[1], [0], [0], [1], [0, 0, 1, 1], [], []>} : vector<8x48xbf16>, vector<48x16xbf16>, vector<8x16xf32> -> vector<8x16xf32>
    %c0_15 = arith.constant 0 : index
    %c0_16 = arith.constant 0 : index
    %20 = vector.load %arg7[%c0_15, %c0_16] : memref<1x16xf32, #tpu.memory_space<vmem>>, vector<1x16xf32>
    %21 = vector.broadcast %20 : vector<1x16xf32> to vector<8x16xf32>
    %22 = arith.addf %19, %21 : vector<8x16xf32>
    %c0_17 = arith.constant 0 : index
    %c0_18 = arith.constant 0 : index
    %23 = vector.load %arg8[%c0_17, %c0_18] : memref<8x16xf32, #tpu.memory_space<vmem>>, vector<8x16xf32>
    tpu.vector_store %arg8[%c0_17, %c0_18], %22 {strides = array<i32>} : memref<8x16xf32, #tpu.memory_space<vmem>>, vector<8x16xf32>,
    return
  }
  func.func @transform_0(%arg0: i32) -> (i32, i32) {
    %c0_i32 = arith.constant 0 : i32
    %c0_i32_0 = arith.constant 0 : i32
    return %arg0, %c0_i32 : i32, i32
  }
  func.func @transform_1(%arg0: i32) -> (i32, i32) {
    %c0_i32 = arith.constant 0 : i32
    %c0_i32_0 = arith.constant 0 : i32
    %c0_i32_1 = arith.constant 0 : i32
    return %c0_i32, %c0_i32_0 : i32, i32
  }
  func.func @transform_2(%arg0: i32) -> (i32, i32) {
    %c0_i32 = arith.constant 0 : i32
    %c0_i32_0 = arith.constant 0 : i32
    %c0_i32_1 = arith.constant 0 : i32
    return %c0_i32, %c0_i32_0 : i32, i32
  }
  func.func @transform_3(%arg0: i32) -> (i32, i32) {
    %c0_i32 = arith.constant 0 : i32
    %c0_i32_0 = arith.constant 0 : i32
    %c0_i32_1 = arith.constant 0 : i32
    return %c0_i32, %c0_i32_0 : i32, i32
  }
  func.func @transform_4(%arg0: i32) -> (i32, i32) {
    %c0_i32 = arith.constant 0 : i32
    %c0_i32_0 = arith.constant 0 : i32
    %c0_i32_1 = arith.constant 0 : i32
    return %c0_i32, %c0_i32_0 : i32, i32
  }
  func.func @transform_5(%arg0: i32) -> (i32, i32) {
    %c0_i32 = arith.constant 0 : i32
    %c0_i32_0 = arith.constant 0 : i32
    %c0_i32_1 = arith.constant 0 : i32
    return %c0_i32, %c0_i32_0 : i32, i32
  }
  func.func @transform_6(%arg0: i32) -> (i32, i32) {
    %c0_i32 = arith.constant 0 : i32
    %c0_i32_0 = arith.constant 0 : i32
    %c0_i32_1 = arith.constant 0 : i32
    return %c0_i32, %c0_i32_0 : i32, i32
  }
  func.func @transform_7(%arg0: i32) -> (i32, i32) {
    %c0_i32 = arith.constant 0 : i32
    %c0_i32_0 = arith.constant 0 : i32
    return %arg0, %c0_i32 : i32, i32
  }
}

</mosaic_0001>

<llo_original>
// kernel: forward.1
$region0: #{forward.1}
  #allocation0 [shape = 'u32[]', space=smem, size = 0x4, offset = 0x4, fixed_abs, tag = 'smem constant byte address 0x4 - core index']
  #allocation1 [shape = 'u32[144,128]{1,0:T(1,128)}', space=vmem, size = 0x12000, scoped, tag = 'internal scratch']
  %s0 = inlined_call_operand.vmem [shape: f32[8,32], index: 0, kind: input, shape index: {}]
  %s1 = inlined_call_operand.hbm [shape: bf16[32,64], index: 1, kind: input, shape index: {}]
  %s2 = inlined_call_operand.hbm [shape: bf16[64,48], index: 2, kind: input, shape index: {}]
  %s3 = inlined_call_operand.vmem [shape: bf16[48,16], index: 3, kind: input, shape index: {}]
  %s4 = inlined_call_operand.hbm [shape: f32[1,64], index: 4, kind: input, shape index: {}]
  %s5 = inlined_call_operand.vmem [shape: f32[1,48], index: 5, kind: input, shape index: {}]
  %s6 = inlined_call_operand.vmem [shape: f32[1,16], index: 6, kind: input, shape index: {}]
  %s7 = inlined_call_operand.hbm [shape: f32[8,16], index: 7, kind: output, shape index: {}]
  %s8 = sld [smem:[#allocation0]]
  $region50: #{forward.1} parent=0
    _
  %s10 = ssub.s32 1, %s8
  %s11 = scalar_select 0, %s10, %s8
  $region1: #{forward.1} parent=0
    #allocation2 [shape = 'u8[8192]{0}', space=vmem, size = 0x2000, scoped, tag = 'input window, operand 1, single buffered']
    #allocation3 [shape = 's32[1]{0}', space=sflag, size = 0x4, scoped, tag = 'scoped memory for forward.1']
    #allocation4 [shape = 's32[1]{0}', space=sflag, size = 0x4, scoped, tag = 'scoped memory for forward.1']
    #allocation5 [shape = 'u8[16384]{0}', space=vmem, size = 0x4000, scoped, tag = 'input window, operand 2, single buffered']
    #allocation6 [shape = 's32[1]{0}', space=sflag, size = 0x4, scoped, tag = 'scoped memory for forward.1']
    #allocation7 [shape = 'u8[512]{0}', space=vmem, size = 0x400, scoped, tag = 'input window, operand 4, single buffered']
    #allocation8 [shape = 'u8[4096]{0}', space=vmem, size = 0x1000, scoped, tag = 'output window, operand 0, single buffered']
    %12 = vsyncpa [#allocation3], 0
    %13 = vsyncpa [#allocation6], 0
    %14 = vsyncpa [#allocation4], 0
    // Predicated region
    $region2: #{forward.1} parent=1 // pred_check
      _
    $region3: #{forward.1} parent=1 // pred_check_branch
      %16 = sbr.rel (0) target = $region5
    $region4: #{forward.1} parent=1 // pred_region
      _
    $region5: #{forward.1} parent=1 // pred_fallthru
      _
    // Predicated region
    $region6: #{forward.1} parent=1 // pred_check
      _
    $region7: #{forward.1} parent=1 // pred_check_branch
      %18 = sbr.rel (0) target = $region9
    $region8: #{forward.1} parent=1 // pred_region
      %s20 = ssub.s32 256, 256
      %21 = vsyncadd [#allocation3], %s20
      %s22 = sshll.u32 [#allocation2], 4
      %s23 = int_to_ptr.vmem [resolvable:$true] %s22
      %28 = dma.hbm_to_vmem [thread:$0]  %s1, 256, %s23, [#allocation3], 64, 64, 4
    $region9: #{forward.1} parent=1 // pred_fallthru
      _
    // Predicated region
    $region10: #{forward.1} parent=1 // pred_check
      _
    $region11: #{forward.1} parent=1 // pred_check_branch
      %30 = sbr.rel (0) target = $region13
    $region12: #{forward.1} parent=1 // pred_region
      %s32 = ssub.s32 512, 512
      %33 = vsyncadd [#allocation6], %s32
      %s34 = sshll.u32 [#allocation5], 4
      %s35 = int_to_ptr.vmem [resolvable:$true] %s34
      %40 = dma.hbm_to_vmem [thread:$0]  %s2, 512, %s35, [#allocation6], 64, 64, 4
    $region13: #{forward.1} parent=1 // pred_fallthru
      _
    // Predicated region
    $region14: #{forward.1} parent=1 // pred_check
      _
    $region15: #{forward.1} parent=1 // pred_check_branch
      %42 = sbr.rel (0) target = $region17
    $region16: #{forward.1} parent=1 // pred_region
      _
    $region17: #{forward.1} parent=1 // pred_fallthru
      _
    // Predicated region
    $region18: #{forward.1} parent=1 // pred_check
      _
    $region19: #{forward.1} parent=1 // pred_check_branch
      %44 = sbr.rel (0) target = $region21
    $region20: #{forward.1} parent=1 // pred_region
      %s46 = ssub.s32 16, 16
      %47 = vsyncadd [#allocation6], %s46
      %s49 = sshll.u32 [#allocation7], 4
      %s50 = int_to_ptr.vmem [resolvable:$true] %s49
      %52 = dma.hbm_to_vmem [thread:$0]  %s4, 16, %s50, [#allocation6]
    $region21: #{forward.1} parent=1 // pred_fallthru
      _
    // Predicated region
    $region22: #{forward.1} parent=1 // pred_check
      _
    $region23: #{forward.1} parent=1 // pred_check_branch
      %54 = sbr.rel (0) target = $region25
    $region24: #{forward.1} parent=1 // pred_region
      _
    $region25: #{forward.1} parent=1 // pred_fallthru
      _
    // Predicated region
    $region26: #{forward.1} parent=1 // pred_check
      _
    $region27: #{forward.1} parent=1 // pred_check_branch
      %56 = sbr.rel (0) target = $region29
    $region28: #{forward.1} parent=1 // pred_region
      _
    $region29: #{forward.1} parent=1 // pred_fallthru
      _
    // Predicated region
    $region30: #{forward.1} parent=1 // pred_check
      _
    $region31: #{forward.1} parent=1 // pred_check_branch
      %58 = sbr.rel (0) target = $region33
    $region32: #{forward.1} parent=1 // pred_region
      %59 = dma.done [#allocation3], 256
    $region33: #{forward.1} parent=1 // pred_fallthru
      _
    // Predicated region
    $region34: #{forward.1} parent=1 // pred_check
      _
    $region35: #{forward.1} parent=1 // pred_check_branch
      %61 = sbr.rel (0) target = $region37
    $region36: #{forward.1} parent=1 // pred_region
      %62 = dma.done [#allocation6], 512
    $region37: #{forward.1} parent=1 // pred_fallthru
      _
    // Predicated region
    $region38: #{forward.1} parent=1 // pred_check
      _
    $region39: #{forward.1} parent=1 // pred_check_branch
      %64 = sbr.rel (0) target = $region41
    $region40: #{forward.1} parent=1 // pred_region
      %65 = dma.done [#allocation6], 16
    $region41: #{forward.1} parent=1 // pred_fallthru
      _
    %v67 = vld [vmem:[%s0] sm:$0xff]
    %v68 = vpack.c.bf16 %v67, %v67
    %v69 = vld [vmem:[#allocation2] sm:$0xf]
    %v70 = vld [vmem:[#allocation2 + $0x4] sm:$0xf]
    %v71 = vld [vmem:[#allocation2 + $0x8] sm:$0xf]
    %v72 = vld [vmem:[#allocation2 + $0xc] sm:$0xf]
    %v73 = vld [vmem:[#allocation7] sm:$0x1]
    %v75 = vlaneseq
    %v76 = vshrl.u32 %v75, 7
    %v77 = vsub.s32 0, %v76
    %v78 = vrot.slane %v73, %v77
    %v84 = vunpack.c.l.b16 %v69
    %v85 = vunpack.c.l.b16 %v70
    %v86 = vunpack.c.l.b16 %v71
    %v87 = vunpack.c.l.b16 %v72
    %v88 = vpack.c.b16 %v85, %v84
    %v89 = vpack.c.b16 %v87, %v86
    %vm92 = vcmask 261120
    %v94 = vsel %vm92, %v68, 0
    %96 = vmatprep.subr.bf16.mxu0 0
    %97 = vmatpush1.bf16.msra.mxu0 %v88
    %98 = vmatprep.subr.bf16.mxu0 0
    %99 = vmatpush1.bf16.msra.mxu0 %v89
    %100 = vmatprep.subr.bf16.mxu0 0
    %101 = vmatpush1.bf16.msra.mxu0 0
    %102 = vmatprep.subr.bf16.mxu0 0
    %103 = vmatpush1.bf16.msra.mxu0 0
    %104 = vmatprep.subr.bf16.mxu0 0
    %105 = vmatpush1.bf16.msra.mxu0 0
    %106 = vmatprep.subr.bf16.mxu0 0
    %107 = vmatpush1.bf16.msra.mxu0 0
    %108 = vmatprep.subr.bf16.mxu0 0
    %109 = vmatpush1.bf16.msra.mxu0 0
    %110 = vmatprep.subr.bf16.mxu0 0
    %111 = vmatpush1.bf16.msra.mxu0 0
    %112 = vmatprep.subr.bf16.mxu0 0
    %113 = vmatpush1.bf16.msra.mxu0 0
    %114 = vmatprep.subr.bf16.mxu0 0
    %115 = vmatpush1.bf16.msra.mxu0 0
    %116 = vmatprep.subr.bf16.mxu0 0
    %117 = vmatpush1.bf16.msra.mxu0 0
    %118 = vmatprep.subr.bf16.mxu0 0
    %119 = vmatpush1.bf16.msra.mxu0 0
    %120 = vmatprep.subr.bf16.mxu0 0
    %121 = vmatpush1.bf16.msra.mxu0 0
    %122 = vmatprep.subr.bf16.mxu0 0
    %123 = vmatpush1.bf16.msra.mxu0 0
    %124 = vmatprep.subr.bf16.mxu0 0
    %125 = vmatpush1.bf16.msra.mxu0 0
    %126 = vmatprep.subr.bf16.mxu0 0
    %127 = vmatpush1.bf16.msra.mxu0 0
    %128 = vmatprep.mubr.bf16.mxu0 0
    %129 = vmatmul.mubr.bf16.gmra.mrb[0].mxu0 %v94
    %v130 = vpop.f32.mrb[0].mxu0
    %v131 = vadd.f32 %v78, %v130
    %v132 = vpop.f32.mrb[0].mxu0
    %v133 = vpop.f32.mrb[0].mxu0
    %v134 = vpop.f32.mrb[0].mxu0
    %135 = vdwg.mxu0
    %v136 = vmax.f32 %v131, 0.0
    %v137 = vpack.c.bf16 %v136, %v136
    %v138 = vld [vmem:[#allocation5] sm:$0xf]
    %v139 = vld [vmem:[#allocation5 + $0x4] sm:$0xf]
    %v140 = vld [vmem:[#allocation5 + $0x8] sm:$0xf]
    %v141 = vld [vmem:[#allocation5 + $0xc] sm:$0xf]
    %v142 = vld [vmem:[#allocation5 + $0x10] sm:$0xf]
    %v143 = vld [vmem:[#allocation5 + $0x14] sm:$0xf]
    %v144 = vld [vmem:[#allocation5 + $0x18] sm:$0xf]
    %v145 = vld [vmem:[#allocation5 + $0x1c] sm:$0xf]
    %v146 = vld [vmem:[%s5] sm:$0x1]
    %v148 = vlaneseq
    %v149 = vshrl.u32 %v148, 7
    %v150 = vsub.s32 0, %v149
    %v151 = vrot.slane %v146, %v150
    %v161 = vunpack.c.l.b16 %v138
    %v162 = vunpack.c.l.b16 %v139
    %v163 = vunpack.c.l.b16 %v140
    %v164 = vunpack.c.l.b16 %v141
    %v165 = vunpack.c.l.b16 %v142
    %v166 = vunpack.c.l.b16 %v143
    %v167 = vunpack.c.l.b16 %v144
    %v168 = vunpack.c.l.b16 %v145
    %v169 = vpack.c.b16 %v162, %v161
    %v170 = vpack.c.b16 %v164, %v163
    %v171 = vpack.c.b16 %v166, %v165
    %v172 = vpack.c.b16 %v168, %v167
    %vm177 = vcmask 523264
    %v179 = vsel %vm177, %v137, 0
    %181 = vmatprep.subr.bf16.mxu0 0
    %182 = vmatpush1.bf16.msra.mxu0 %v169
    %183 = vmatprep.subr.bf16.mxu0 0
    %184 = vmatpush1.bf16.msra.mxu0 %v170
    %185 = vmatprep.subr.bf16.mxu0 0
    %186 = vmatpush1.bf16.msra.mxu0 %v171
    %187 = vmatprep.subr.bf16.mxu0 0
    %188 = vmatpush1.bf16.msra.mxu0 %v172
    %189 = vmatprep.subr.bf16.mxu0 0
    %190 = vmatpush1.bf16.msra.mxu0 0
    %191 = vmatprep.subr.bf16.mxu0 0
    %192 = vmatpush1.bf16.msra.mxu0 0
    %193 = vmatprep.subr.bf16.mxu0 0
    %194 = vmatpush1.bf16.msra.mxu0 0
    %195 = vmatprep.subr.bf16.mxu0 0
    %196 = vmatpush1.bf16.msra.mxu0 0
    %197 = vmatprep.subr.bf16.mxu0 0
    %198 = vmatpush1.bf16.msra.mxu0 0
    %199 = vmatprep.subr.bf16.mxu0 0
    %200 = vmatpush1.bf16.msra.mxu0 0
    %201 = vmatprep.subr.bf16.mxu0 0
    %202 = vmatpush1.bf16.msra.mxu0 0
    %203 = vmatprep.subr.bf16.mxu0 0
    %204 = vmatpush1.bf16.msra.mxu0 0
    %205 = vmatprep.subr.bf16.mxu0 0
    %206 = vmatpush1.bf16.msra.mxu0 0
    %207 = vmatprep.subr.bf16.mxu0 0
    %208 = vmatpush1.bf16.msra.mxu0 0
    %209 = vmatprep.subr.bf16.mxu0 0
    %210 = vmatpush1.bf16.msra.mxu0 0
    %211 = vmatprep.subr.bf16.mxu0 0
    %212 = vmatpush1.bf16.msra.mxu0 0
    %213 = vmatprep.mubr.bf16.mxu0 0
    %214 = vmatmul.mubr.bf16.gmra.mrb[0].mxu0 %v179
    %v215 = vpop.f32.mrb[0].mxu0
    %v216 = vadd.f32 %v151, %v215
    %v217 = vpop.f32.mrb[0].mxu0
    %v218 = vpop.f32.mrb[0].mxu0
    %v219 = vpop.f32.mrb[0].mxu0
    %220 = vdwg.mxu0
    %v221 = vmax.f32 %v216, 0.0
    %v222 = vpack.c.bf16 %v221, %v221
    %v223 = vld [vmem:[%s3] sm:$0xf]
    %v224 = vld [vmem:[%s3 + $0x4] sm:$0xf]
    %v225 = vld [vmem:[%s3 + $0x8] sm:$0xf]
    %v226 = vld [vmem:[%s3 + $0xc] sm:$0xf]
    %v227 = vld [vmem:[%s3 + $0x10] sm:$0xf]
    %v228 = vld [vmem:[%s3 + $0x14] sm:$0xf]
    %v229 = vld [vmem:[%s6] sm:$0x1]
    %v231 = vlaneseq
    %v232 = vshrl.u32 %v231, 7
    %v233 = vsub.s32 0, %v232
    %v234 = vrot.slane %v229, %v233
    %v242 = vunpack.c.l.b16 %v223
    %v243 = vunpack.c.l.b16 %v224
    %v244 = vunpack.c.l.b16 %v225
    %v245 = vunpack.c.l.b16 %v226
    %v246 = vunpack.c.l.b16 %v227
    %v247 = vunpack.c.l.b16 %v228
    %v248 = vpack.c.b16 %v243, %v242
    %v249 = vpack.c.b16 %v245, %v244
    %v250 = vpack.c.b16 %v247, %v246
    %vm254 = vcmask 392192
    %v256 = vsel %vm254, %v222, 0
    %258 = vmatprep.subr.bf16.mxu0 0
    %259 = vmatpush1.bf16.msra.mxu0 %v248
    %260 = vmatprep.subr.bf16.mxu0 0
    %261 = vmatpush1.bf16.msra.mxu0 %v249
    %262 = vmatprep.subr.bf16.mxu0 0
    %263 = vmatpush1.bf16.msra.mxu0 %v250
    %264 = vmatprep.subr.bf16.mxu0 0
    %265 = vmatpush1.bf16.msra.mxu0 0
    %266 = vmatprep.subr.bf16.mxu0 0
    %267 = vmatpush1.bf16.msra.mxu0 0
    %268 = vmatprep.subr.bf16.mxu0 0
    %269 = vmatpush1.bf16.msra.mxu0 0
    %270 = vmatprep.subr.bf16.mxu0 0
    %271 = vmatpush1.bf16.msra.mxu0 0
    %272 = vmatprep.subr.bf16.mxu0 0
    %273 = vmatpush1.bf16.msra.mxu0 0
    %274 = vmatprep.subr.bf16.mxu0 0
    %275 = vmatpush1.bf16.msra.mxu0 0
    %276 = vmatprep.subr.bf16.mxu0 0
    %277 = vmatpush1.bf16.msra.mxu0 0
    %278 = vmatprep.subr.bf16.mxu0 0
    %279 = vmatpush1.bf16.msra.mxu0 0
    %280 = vmatprep.subr.bf16.mxu0 0
    %281 = vmatpush1.bf16.msra.mxu0 0
    %282 = vmatprep.subr.bf16.mxu0 0
    %283 = vmatpush1.bf16.msra.mxu0 0
    %284 = vmatprep.subr.bf16.mxu0 0
    %285 = vmatpush1.bf16.msra.mxu0 0
    %286 = vmatprep.subr.bf16.mxu0 0
    %287 = vmatpush1.bf16.msra.mxu0 0
    %288 = vmatprep.subr.bf16.mxu0 0
    %289 = vmatpush1.bf16.msra.mxu0 0
    %290 = vmatprep.mubr.bf16.mxu0 0
    %291 = vmatmul.mubr.bf16.gmra.mrb[0].mxu0 %v256
    %v292 = vpop.f32.mrb[0].mxu0
    %v293 = vadd.f32 %v234, %v292
    %v294 = vpop.f32.mrb[0].mxu0
    %v295 = vpop.f32.mrb[0].mxu0
    %v296 = vpop.f32.mrb[0].mxu0
    %297 = vdwg.mxu0
    %vm298 = vcmask 130048
    %299 = vst.msk [vmem:[#allocation8] sm:$0xff] %vm298, %v293
    // Predicated region
    $region42: #{forward.1} parent=1 // pred_check
      _
    $region43: #{forward.1} parent=1 // pred_check_branch
      %301 = sbr.rel (0) target = $region45
    $region44: #{forward.1} parent=1 // pred_region
      %s303 = ssub.s32 128, 128
      %304 = vsyncadd [#allocation4], %s303
      %s306 = sshll.u32 [#allocation8], 4
      %s307 = int_to_ptr.vmem [resolvable:$true] %s306
      %309 = dma.vmem_to_hbm [thread:$0]  %s307, 128, %s7, [#allocation4]
    $region45: #{forward.1} parent=1 // pred_fallthru
      _
    // Predicated region
    $region46: #{forward.1} parent=1 // pred_check
      _
    $region47: #{forward.1} parent=1 // pred_check_branch
      %311 = sbr.rel (0) target = $region49
    $region48: #{forward.1} parent=1 // pred_region
      %312 = dma.done [#allocation4], 128
    $region49: #{forward.1} parent=1 // pred_fallthru
      _
    %313 = vsyncpa [#allocation3], 1
    %314 = vsyncpa [#allocation6], 1
    %315 = vsyncpa [#allocation4], 1

</llo_original>
